<compile_context>
chip_gen: v7x
topology: tpu7x:2x2x1
jax: 0.10.0
libtpu: 0.0.40
codegen_flags: <defaults>
</compile_context>

<pallas_src>
import functools
import jax
import jax.numpy as jnp
from jax.experimental import pallas as pl
from jax.experimental.pallas import tpu as pltpu

NEG_PAD = -1e30   # bias for padded vocab columns -> exp() underflows to 0
TS = 8            # GRU steps per recurrence grid iteration (one sublane group)


def _round_up(x, m):
    return (x + m - 1) // m * m


def _vmem_limit(nbytes):
    # modest headroom, capped well below v7x's 64 MiB physical VMEM
    return int(min(48 << 20, max(8 << 20, 2 * int(nbytes) + (2 << 20))))


# ----------------------------------------------------------------------------
# Phase 1: batched input-side gates  Gi = ReLU(x) @ W_i + b_i
# ----------------------------------------------------------------------------
def input_gates_kernel(x_ref, w_i_ref, b_i_ref, gi_ref):
    x = jnp.maximum(x_ref[...], 0)                       # bf16 ReLU, (TS, Hp)
    gi_ref[...] = (
        jnp.dot(x, w_i_ref[...], preferred_element_type=jnp.float32)
        + b_i_ref[...])                                   # (TS, 3Hp) f32


# ----------------------------------------------------------------------------
# Phase 2: serial GRU recurrence, TS steps per grid iteration
# ----------------------------------------------------------------------------
def gru_recurrence_kernel(gi_ref, w_h_ref, b_h_ref, h0_ref,
                          hall_ref, hT_ref, *, n_steps):
    Hp = hT_ref.shape[-1]
    ts = hall_ref.shape[0]
    c = pl.program_id(0)

    @pl.when(c == 0)
    def _():
        hT_ref[...] = h0_ref[...]

    h = hT_ref[...]                                       # (1, Hp) f32 carry
    rows = []
    for i in range(ts):                                   # static unroll
        gi = gi_ref[pl.ds(i, 1), :]                       # (1, 3Hp) f32
        # bf16 weights fed straight to the MXU; only the (1,Hp) h is cast.
        gh = jnp.dot(h.astype(jnp.bfloat16), w_h_ref[...],
                     preferred_element_type=jnp.float32) + b_h_ref[...]
        r = jax.nn.sigmoid(gi[:, :Hp] + gh[:, :Hp])
        z = jax.nn.sigmoid(gi[:, Hp:2 * Hp] + gh[:, Hp:2 * Hp])
        n = jnp.tanh(gi[:, 2 * Hp:] + r * gh[:, 2 * Hp:])
        h_new = (1.0 - z) * n + z * h
        # padded tail steps (c*ts + i >= n_steps) must not advance the state
        h = jnp.where(c * ts + i < n_steps, h_new, h)
        rows.append(h)
    hall_ref[...] = jnp.concatenate(rows, axis=0)         # one dense store
    hT_ref[...] = h


# ----------------------------------------------------------------------------
# Phase 3: batched output projection + log-softmax over a (TT, Hp) row tile
# ----------------------------------------------------------------------------
def project_logsoftmax_kernel(h_ref, w_out_ref, b_out_ref, logp_ref):
    logits = (jnp.dot(h_ref[...].astype(jnp.bfloat16), w_out_ref[...],
                      preferred_element_type=jnp.float32)
              + b_out_ref[...])                           # (TT, Vp) f32
    m = jnp.max(logits, axis=-1, keepdims=True)
    s = jnp.sum(jnp.exp(logits - m), axis=-1, keepdims=True)
    logp_ref[...] = logits - (jnp.log(s) + m)


# ----------------------------------------------------------------------------
# Parameters: raw (PyTorch layout, f32) + packed (fused / padded / bf16)
# ----------------------------------------------------------------------------
def make_decoder_params(hidden_size, output_size, key):
    ks = jax.random.split(key, 7)
    H, V = hidden_size, output_size
    bound = 1.0 / jnp.sqrt(jnp.float32(H))
    return dict(
        emb=jax.random.normal(ks[0], (V, H), jnp.float32),                  # nn.Embedding
        w_ih=jax.random.uniform(ks[1], (3 * H, H), jnp.float32, -bound, bound),
        w_hh=jax.random.uniform(ks[2], (3 * H, H), jnp.float32, -bound, bound),
        b_ih=jax.random.uniform(ks[3], (3 * H,), jnp.float32, -bound, bound),
        b_hh=jax.random.uniform(ks[4], (3 * H,), jnp.float32, -bound, bound),
        w_out=jax.random.uniform(ks[5], (V, H), jnp.float32, -bound, bound),  # nn.Linear
        b_out=jax.random.uniform(ks[6], (V,), jnp.float32, -bound, bound),
    )


def pack_params(raw, hidden_size, output_size):
    """Split r/z/n gates, transpose to (in,out), fuse, pad to 128, cast bf16."""
    H, V = hidden_size, output_size
    Hp = _round_up(H, 128)
    Vp = _round_up(V, 128)

    def padded(x, rows, cols):
        out = jnp.zeros((rows, cols), jnp.float32)
        return out.at[: x.shape[0], : x.shape[1]].set(x)

    emb = padded(raw["emb"], V, Hp).astype(jnp.bfloat16)          # (V, Hp)

    # PyTorch GRU gate order in the (3H, H) stacks is (r, z, n).
    w_ir, w_iz, w_in_ = (w.T for w in jnp.split(raw["w_ih"], 3, axis=0))
    w_hr, w_hz, w_hn = (w.T for w in jnp.split(raw["w_hh"], 3, axis=0))
    b_ir, b_iz, b_in_ = (b.reshape(1, H) for b in jnp.split(raw["b_ih"], 3))
    b_hr, b_hz, b_hn = (b.reshape(1, H) for b in jnp.split(raw["b_hh"], 3))

    fuse_w = lambda ws: jnp.concatenate([padded(w, Hp, Hp) for w in ws], axis=1)
    fuse_b = lambda bs: jnp.concatenate([padded(b, 1, Hp) for b in bs], axis=1)

    w_i = fuse_w([w_ir, w_iz, w_in_]).astype(jnp.bfloat16)        # (Hp, 3Hp)
    w_h = fuse_w([w_hr, w_hz, w_hn]).astype(jnp.bfloat16)         # (Hp, 3Hp)
    b_i = fuse_b([b_ir, b_iz, b_in_])                             # (1, 3Hp) f32
    b_h = fuse_b([b_hr, b_hz, b_hn])                              # (1, 3Hp) f32

    w_out = padded(raw["w_out"].T, Hp, Vp).astype(jnp.bfloat16)   # (Hp, Vp)
    b_out = jnp.full((1, Vp), NEG_PAD, jnp.float32).at[:, :V].set(
        raw["b_out"].reshape(1, V))

    return dict(H=H, V=V, Hp=Hp, Vp=Vp, emb=emb,
                w_i=w_i, w_h=w_h, b_i=b_i, b_h=b_h,
                w_out=w_out, b_out=b_out)


# ----------------------------------------------------------------------------
# Wrappers
# ----------------------------------------------------------------------------
def decoder_rnn_decode(packed, tokens, hidden):
    """tokens: (T,) int32, hidden: (1,1,H). Returns (logp (T,V), hidden (1,1,H))."""
    H, V, Hp, Vp = packed["H"], packed["V"], packed["Hp"], packed["Vp"]
    T = int(tokens.shape[0])
    Tp = _round_up(T, TS)
    n_chunks = Tp // TS

    tokens = jnp.clip(jnp.asarray(tokens, jnp.int32), 0, V - 1)
    # Pre-gather embedding rows in the wrapper (one XLA gather of bf16 rows);
    # padded tail rows are zero and masked out of the recurrence.
    x = jnp.zeros((Tp, Hp), jnp.bfloat16).at[:T].set(
        jnp.take(packed["emb"], tokens, axis=0))
    h0 = jnp.zeros((1, Hp), jnp.float32).at[:, :H].set(
        hidden.reshape(1, H).astype(jnp.float32))

    nbytes = lambda *names: sum(int(packed[k].size) * packed[k].dtype.itemsize
                                for k in names)
    resident1 = lambda s, m: pl.BlockSpec(s, m, pipeline_mode=pl.Buffered(1))

    # ---- phase 1: Gi = ReLU(emb rows) @ W_i + b_i, batched over all T ------
    gi = pl.pallas_call(
        input_gates_kernel,
        grid=(n_chunks,),
        in_specs=[
            pl.BlockSpec((TS, Hp), lambda c: (c, 0)),
            resident1((Hp, 3 * Hp), lambda c: (0, 0)),
            resident1((1, 3 * Hp), lambda c: (0, 0)),
        ],
        out_specs=pl.BlockSpec((TS, 3 * Hp), lambda c: (c, 0)),
        out_shape=jax.ShapeDtypeStruct((Tp, 3 * Hp), jnp.float32),
        compiler_params=pltpu.CompilerParams(
            dimension_semantics=("parallel",),
            vmem_limit_bytes=_vmem_limit(
                nbytes("w_i", "b_i") + 2 * TS * (2 * Hp + 4 * 3 * Hp))),
    )(x, packed["w_i"], packed["b_i"])

    # ---- phase 2: serial GRU recurrence, TS steps per grid iteration -------
    h_all, h_last = pl.pallas_call(
        functools.partial(gru_recurrence_kernel, n_steps=T),
        grid=(n_chunks,),
        in_specs=[
            pl.BlockSpec((TS, 3 * Hp), lambda c: (c, 0)),
            resident1((Hp, 3 * Hp), lambda c: (0, 0)),
            resident1((1, 3 * Hp), lambda c: (0, 0)),
            resident1((1, Hp), lambda c: (0, 0)),
        ],
        out_specs=(
            pl.BlockSpec((TS, Hp), lambda c: (c, 0)),   # all hidden states
            pl.BlockSpec((1, Hp), lambda c: (0, 0)),    # carried final hidden
        ),
        out_shape=(
            jax.ShapeDtypeStruct((Tp, Hp), jnp.float32),
            jax.ShapeDtypeStruct((1, Hp), jnp.float32),
        ),
        compiler_params=pltpu.CompilerParams(
            dimension_semantics=("arbitrary",),          # loop-carried state
            vmem_limit_bytes=_vmem_limit(
                nbytes("w_h", "b_h") + 2 * TS * 4 * (3 * Hp + Hp) + 4 * Hp)),
    )(gi, packed["w_h"], packed["b_h"], h0)

    # ---- phase 3: batched output projection + log-softmax ------------------
    TT = min(Tp, 128)
    while Tp % TT:
        TT -= TS
    logp_p = pl.pallas_call(
        project_logsoftmax_kernel,
        grid=(Tp // TT,),
        in_specs=[
            pl.BlockSpec((TT, Hp), lambda i: (i, 0)),
            resident1((Hp, Vp), lambda i: (0, 0)),
            resident1((1, Vp), lambda i: (0, 0)),
        ],
        out_specs=pl.BlockSpec((TT, Vp), lambda i: (i, 0)),
        out_shape=jax.ShapeDtypeStruct((Tp, Vp), jnp.float32),
        compiler_params=pltpu.CompilerParams(
            dimension_semantics=("parallel",),
            vmem_limit_bytes=_vmem_limit(
                nbytes("w_out", "b_out") + 2 * TT * 4 * (Hp + Vp))),
    )(h_all, packed["w_out"], packed["b_out"])

    logp = logp_p[:T, :V]
    h_new = h_last[:, :H].reshape(1, 1, H)
    return logp, h_new


def decoder_rnn_forward(packed, token, hidden):
    """Matches DecoderRNN.forward: returns (log_probs (1,V), hidden (1,1,H))."""
    tokens = jnp.asarray(token, jnp.int32).reshape((1,))
    return decoder_rnn_decode(packed, tokens, hidden)


# ----------------------------------------------------------------------------
# Pure-JAX reference (same bf16 weight storage & matmul-boundary rounding)
# ----------------------------------------------------------------------------
def reference_decode(raw, tokens, hidden):
    H = hidden.shape[-1]
    q = lambda w: w.astype(jnp.bfloat16).astype(jnp.float32)    # weight storage
    rb = lambda a: a.astype(jnp.bfloat16).astype(jnp.float32)   # matmul-boundary cast
    emb = q(raw["emb"])
    w_ir, w_iz, w_in_ = (q(w.T) for w in jnp.split(raw["w_ih"], 3, axis=0))
    w_hr, w_hz, w_hn = (q(w.T) for w in jnp.split(raw["w_hh"], 3, axis=0))
    b_ir, b_iz, b_in_ = (b.reshape(1, H) for b in jnp.split(raw["b_ih"], 3))
    b_hr, b_hz, b_hn = (b.reshape(1, H) for b in jnp.split(raw["b_hh"], 3))
    w_out = q(raw["w_out"].T)
    b_out = raw["b_out"].reshape(1, -1)

    h = hidden.reshape(1, H).astype(jnp.float32)
    logps = []
    for tok in [int(t) for t in tokens]:
        x = jnp.maximum(emb[tok].reshape(1, H), 0.0)
        hb = rb(h)
        r = jax.nn.sigmoid(x @ w_ir + b_ir + hb @ w_hr + b_hr)
        z = jax.nn.sigmoid(x @ w_iz + b_iz + hb @ w_hz + b_hz)
        n = jnp.tanh(x @ w_in_ + b_in_ + r * (hb @ w_hn + b_hn))
        h = (1.0 - z) * n + z * h
        logits = rb(h) @ w_out + b_out
        logps.append(jax.nn.log_softmax(logits, axis=1))
    return jnp.concatenate(logps, axis=0), h.reshape(1, 1, H)


if __name__ == "__main__":
    hidden_size = 32
    output_size = 64   # vocab size

    key = jax.random.PRNGKey(0)
    raw = make_decoder_params(hidden_size, output_size, key)
    packed = pack_params(raw, hidden_size, output_size)

    hidden0 = jnp.zeros((1, 1, hidden_size), jnp.float32)   # init_hidden()

    # ---- single-step forward (exactly the module's forward signature) ------
    token = jnp.int32(5)
    logp1, h1 = decoder_rnn_forward(packed, token, hidden0)
    jax.block_until_ready((logp1, h1))
    ref_logp1, ref_h1 = reference_decode(raw, jnp.array([5], jnp.int32), hidden0)
    assert logp1.shape == (1, output_size) and h1.shape == (1, 1, hidden_size)
    assert jnp.allclose(logp1, ref_logp1, atol=2e-3), "single-step log-softmax mismatch"
    assert jnp.allclose(h1, ref_h1, atol=2e-3), "single-step hidden mismatch"

    # ---- multi-step decode (batched phases 1 & 3, chunked recurrence) ------
    tokens = jnp.array([5, 1, 63, 0, 17, 42, 7, 30], jnp.int32)
    logpT, hT = decoder_rnn_decode(packed, tokens, hidden0)
    jax.block_until_ready((logpT, hT))
    ref_logpT, ref_hT = reference_decode(raw, tokens, hidden0)
    assert logpT.shape == (int(tokens.shape[0]), output_size)
    assert jnp.allclose(logpT, ref_logpT, atol=2e-3), "multi-step log-softmax mismatch"
    assert jnp.allclose(hT, ref_hT, atol=2e-3), "multi-step hidden mismatch"

    print("KERNEL_OK")
</pallas_src>

<mosaic_0001>
module attributes {stable_mosaic.version = 11 : i64} {
  func.func @input_gates_kernel(%arg0: i32, %arg1: memref<8x128xbf16, #tpu.memory_space<vmem>>, %arg2: memref<128x384xbf16, #tpu.memory_space<vmem>>, %arg3: memref<1x384xf32, #tpu.memory_space<vmem>>, %arg4: memref<8x384xf32, #tpu.memory_space<vmem>>) attributes {dimension_semantics = [#tpu.dimension_semantics<parallel>], iteration_bounds = array<i64: 1>, scalar_prefetch = 0 : i64, scratch_operands = 0 : i64, tpu.core_type = #tpu.core_type<tc>, window_params = [{transform_indices = @transform_0, window_bounds = array<i64: 8, 128>}, {pipeline_mode = #tpu.pipeline_mode<synchronous>, transform_indices = @transform_1, window_bounds = array<i64: 128, 384>}, {pipeline_mode = #tpu.pipeline_mode<synchronous>, transform_indices = @transform_2, window_bounds = array<i64: 1, 384>}, {transform_indices = @transform_3, window_bounds = array<i64: 8, 384>}]} {
    %c0 = arith.constant 0 : index
    %c0_0 = arith.constant 0 : index
    %0 = vector.load %arg1[%c0, %c0_0] : memref<8x128xbf16, #tpu.memory_space<vmem>>, vector<8x128xbf16>
    %cst = arith.constant 0.000000e+00 : bf16
    %1 = vector.broadcast %cst : bf16 to vector<8x128xbf16>
    %2 = arith.maximumf %0, %1 : vector<8x128xbf16>
    %c0_1 = arith.constant 0 : index
    %c0_2 = arith.constant 0 : index
    %3 = vector.load %arg2[%c0_1, %c0_2] : memref<128x384xbf16, #tpu.memory_space<vmem>>, vector<128x384xbf16>
    %cst_3 = arith.constant dense<0.000000e+00> : vector<8x384xf32>
    %4 = tpu.matmul %2, %3, %cst_3 {dimension_numbers = #tpu.dot_dimension_numbers<[1], [0], [0], [1], [0, 0, 1, 1], [], []>} : vector<8x128xbf16>, vector<128x384xbf16>, vector<8x384xf32> -> vector<8x384xf32>
    %c0_4 = arith.constant 0 : index
    %c0_5 = arith.constant 0 : index
    %5 = vector.load %arg3[%c0_4, %c0_5] : memref<1x384xf32, #tpu.memory_space<vmem>>, vector<1x384xf32>
    %6 = vector.broadcast %5 : vector<1x384xf32> to vector<8x384xf32>
    %7 = arith.addf %4, %6 : vector<8x384xf32>
    %c0_6 = arith.constant 0 : index
    %c0_7 = arith.constant 0 : index
    %8 = vector.load %arg4[%c0_6, %c0_7] : memref<8x384xf32, #tpu.memory_space<vmem>>, vector<8x384xf32>
    tpu.vector_store %arg4[%c0_6, %c0_7], %7 {strides = array<i32>} : memref<8x384xf32, #tpu.memory_space<vmem>>, vector<8x384xf32>,
    return
  }
  func.func @transform_0(%arg0: i32) -> (i32, i32) {
    %c0_i32 = arith.constant 0 : i32
    %c0_i32_0 = arith.constant 0 : i32
    return %arg0, %c0_i32 : i32, i32
  }
  func.func @transform_1(%arg0: i32) -> (i32, i32) {
    %c0_i32 = arith.constant 0 : i32
    %c0_i32_0 = arith.constant 0 : i32
    %c0_i32_1 = arith.constant 0 : i32
    return %c0_i32, %c0_i32_0 : i32, i32
  }
  func.func @transform_2(%arg0: i32) -> (i32, i32) {
    %c0_i32 = arith.constant 0 : i32
    %c0_i32_0 = arith.constant 0 : i32
    %c0_i32_1 = arith.constant 0 : i32
    return %c0_i32, %c0_i32_0 : i32, i32
  }
  func.func @transform_3(%arg0: i32) -> (i32, i32) {
    %c0_i32 = arith.constant 0 : i32
    %c0_i32_0 = arith.constant 0 : i32
    return %arg0, %c0_i32 : i32, i32
  }
}

</mosaic_0001>

<llo_original>
// kernel: tpu_custom_call.1
$region0: #{tpu_custom_call.1}
  #allocation0 [shape = 'u32[]', space=smem, size = 0x4, offset = 0x4, fixed_abs, tag = 'smem constant byte address 0x4 - core index']
  #allocation1 [shape = 'u32[144,128]{1,0:T(1,128)}', space=vmem, size = 0x12000, scoped, tag = 'internal scratch']
  %s0 = inlined_call_operand.hbm [shape: bf16[8,128], index: 0, kind: input, shape index: {}]
  %s1 = inlined_call_operand.hbm [shape: bf16[128,384], index: 1, kind: input, shape index: {}]
  %s2 = inlined_call_operand.vmem [shape: f32[1,384], index: 2, kind: input, shape index: {}]
  %s3 = inlined_call_operand.hbm [shape: f32[8,384], index: 3, kind: output, shape index: {}]
  %s4 = sld [smem:[#allocation0]]
  $region30: #{tpu_custom_call.1} parent=0
    _
  %s6 = ssub.s32 1, %s4
  %s7 = scalar_select 0, %s6, %s4
  $region1: #{tpu_custom_call.1} parent=0
    #allocation2 [shape = 'u8[2048]{0}', space=vmem, size = 0x800, scoped, tag = 'input window, operand 0, single buffered']
    #allocation3 [shape = 's32[1]{0}', space=sflag, size = 0x4, scoped, tag = 'scoped memory for tpu_custom_call.1']
    #allocation4 [shape = 's32[1]{0}', space=sflag, size = 0x4, scoped, tag = 'scoped memory for tpu_custom_call.1']
    #allocation5 [shape = 'u8[98304]{0}', space=vmem, size = 0x18000, scoped, tag = 'input window, operand 1, single buffered']
    #allocation6 [shape = 's32[1]{0}', space=sflag, size = 0x4, scoped, tag = 'scoped memory for tpu_custom_call.1']
    #allocation7 [shape = 'u8[12288]{0}', space=vmem, size = 0x3000, scoped, tag = 'output window, operand 0, single buffered']
    %8 = vsyncpa [#allocation3], 0
    %9 = vsyncpa [#allocation6], 0
    %10 = vsyncpa [#allocation4], 0
    // Predicated region
    $region2: #{tpu_custom_call.1} parent=1 // pred_check
      _
    $region3: #{tpu_custom_call.1} parent=1 // pred_check_branch
      %12 = sbr.rel (0) target = $region5
    $region4: #{tpu_custom_call.1} parent=1 // pred_region
      %s14 = ssub.s32 64, 64
      %15 = vsyncadd [#allocation3], %s14
      %s17 = sshll.u32 [#allocation2], 4
      %s18 = int_to_ptr.vmem [resolvable:$true] %s17
      %20 = dma.hbm_to_vmem [thread:$0]  %s0, 64, %s18, [#allocation3]
    $region5: #{tpu_custom_call.1} parent=1 // pred_fallthru
      _
    // Predicated region
    $region6: #{tpu_custom_call.1} parent=1 // pred_check
      _
    $region7: #{tpu_custom_call.1} parent=1 // pred_check_branch
      %22 = sbr.rel (0) target = $region9
    $region8: #{tpu_custom_call.1} parent=1 // pred_region
      %s24 = ssub.s32 3072, 3072
      %25 = vsyncadd [#allocation6], %s24
      %s26 = sshll.u32 [#allocation5], 4
      %s27 = int_to_ptr.vmem [resolvable:$true] %s26
      %32 = dma.hbm_to_vmem [thread:$0]  %s1, 3072, %s27, [#allocation6], 192, 192, 12
    $region9: #{tpu_custom_call.1} parent=1 // pred_fallthru
      _
    // Predicated region
    $region10: #{tpu_custom_call.1} parent=1 // pred_check
      _
    $region11: #{tpu_custom_call.1} parent=1 // pred_check_branch
      %34 = sbr.rel (0) target = $region13
    $region12: #{tpu_custom_call.1} parent=1 // pred_region
      _
    $region13: #{tpu_custom_call.1} parent=1 // pred_fallthru
      _
    // Predicated region
    $region14: #{tpu_custom_call.1} parent=1 // pred_check
      _
    $region15: #{tpu_custom_call.1} parent=1 // pred_check_branch
      %36 = sbr.rel (0) target = $region17
    $region16: #{tpu_custom_call.1} parent=1 // pred_region
      %37 = dma.done [#allocation3], 64
    $region17: #{tpu_custom_call.1} parent=1 // pred_fallthru
      _
    // Predicated region
    $region18: #{tpu_custom_call.1} parent=1 // pred_check
      _
    $region19: #{tpu_custom_call.1} parent=1 // pred_check_branch
      %39 = sbr.rel (0) target = $region21
    $region20: #{tpu_custom_call.1} parent=1 // pred_region
      %40 = dma.done [#allocation6], 3072
    $region21: #{tpu_custom_call.1} parent=1 // pred_fallthru
      _
    %v42 = vld [vmem:[#allocation2] sm:$0xf]
    %v43 = vmax.bf16 %v42, 0
    %v44 = vld [vmem:[#allocation5] sm:$0xff]
    %v45 = vld [vmem:[#allocation5 + $0x8] sm:$0xf]
    %v46 = vld [vmem:[#allocation5 + $0xc] sm:$0xff]
    %v47 = vld [vmem:[#allocation5 + $0x14] sm:$0xf]
    %v48 = vld [vmem:[#allocation5 + $0x18] sm:$0xff]
    %v49 = vld [vmem:[#allocation5 + $0x20] sm:$0xf]
    %v50 = vld [vmem:[#allocation5 + $0x24] sm:$0xff]
    %v51 = vld [vmem:[#allocation5 + $0x2c] sm:$0xf]
    %v52 = vld [vmem:[#allocation5 + $0x30] sm:$0xff]
    %v53 = vld [vmem:[#allocation5 + $0x38] sm:$0xf]
    %v54 = vld [vmem:[#allocation5 + $0x3c] sm:$0xff]
    %v55 = vld [vmem:[#allocation5 + $0x44] sm:$0xf]
    %v56 = vld [vmem:[#allocation5 + $0x48] sm:$0xff]
    %v57 = vld [vmem:[#allocation5 + $0x50] sm:$0xf]
    %v58 = vld [vmem:[#allocation5 + $0x54] sm:$0xff]
    %v59 = vld [vmem:[#allocation5 + $0x5c] sm:$0xf]
    %v60 = vld [vmem:[#allocation5 + $0x60] sm:$0xff]
    %v61 = vld [vmem:[#allocation5 + $0x68] sm:$0xf]
    %v62 = vld [vmem:[#allocation5 + $0x6c] sm:$0xff]
    %v63 = vld [vmem:[#allocation5 + $0x74] sm:$0xf]
    %v64 = vld [vmem:[#allocation5 + $0x78] sm:$0xff]
    %v65 = vld [vmem:[#allocation5 + $0x80] sm:$0xf]
    %v66 = vld [vmem:[#allocation5 + $0x84] sm:$0xff]
    %v67 = vld [vmem:[#allocation5 + $0x8c] sm:$0xf]
    %v68 = vld [vmem:[#allocation5 + $0x90] sm:$0xff]
    %v69 = vld [vmem:[#allocation5 + $0x98] sm:$0xf]
    %v70 = vld [vmem:[#allocation5 + $0x9c] sm:$0xff]
    %v71 = vld [vmem:[#allocation5 + $0xa4] sm:$0xf]
    %v72 = vld [vmem:[#allocation5 + $0xa8] sm:$0xff]
    %v73 = vld [vmem:[#allocation5 + $0xb0] sm:$0xf]
    %v74 = vld [vmem:[#allocation5 + $0xb4] sm:$0xff]
    %v75 = vld [vmem:[#allocation5 + $0xbc] sm:$0xf]
    %v76 = vld [vmem:[%s2] sm:$0x7]
    %v78 = vlaneseq
    %v79 = vshrl.u32 %v78, 7
    %v80 = vsub.s32 0, %v79
    %v81 = vrot.slane %v76, %v80
    %v82 = vlaneseq
    %v83 = vshrl.u32 %v82, 7
    %v84 = vsub.s32 1, %v83
    %v85 = vrot.slane %v76, %v84
    %v86 = vlaneseq
    %v87 = vshrl.u32 %v86, 7
    %v88 = vsub.s32 2, %v87
    %v89 = vrot.slane %v76, %v88
    %v125 = vunpack.c.l.b16 %v44
    %v126 = vunpack.c.h.b16 %v44
    %v127 = vunpack.c.l.b16 %v45
    %v128 = vunpack.c.l.b16 %v46
    %v129 = vunpack.c.h.b16 %v46
    %v130 = vunpack.c.l.b16 %v47
    %v131 = vunpack.c.l.b16 %v48
    %v132 = vunpack.c.h.b16 %v48
    %v133 = vunpack.c.l.b16 %v49
    %v134 = vunpack.c.l.b16 %v50
    %v135 = vunpack.c.h.b16 %v50
    %v136 = vunpack.c.l.b16 %v51
    %v137 = vunpack.c.l.b16 %v52
    %v138 = vunpack.c.h.b16 %v52
    %v139 = vunpack.c.l.b16 %v53
    %v140 = vunpack.c.l.b16 %v54
    %v141 = vunpack.c.h.b16 %v54
    %v142 = vunpack.c.l.b16 %v55
    %v143 = vunpack.c.l.b16 %v56
    %v144 = vunpack.c.h.b16 %v56
    %v145 = vunpack.c.l.b16 %v57
    %v146 = vunpack.c.l.b16 %v58
    %v147 = vunpack.c.h.b16 %v58
    %v148 = vunpack.c.l.b16 %v59
    %v149 = vunpack.c.l.b16 %v60
    %v150 = vunpack.c.h.b16 %v60
    %v151 = vunpack.c.l.b16 %v61
    %v152 = vunpack.c.l.b16 %v62
    %v153 = vunpack.c.h.b16 %v62
    %v154 = vunpack.c.l.b16 %v63
    %v155 = vunpack.c.l.b16 %v64
    %v156 = vunpack.c.h.b16 %v64
    %v157 = vunpack.c.l.b16 %v65
    %v158 = vunpack.c.l.b16 %v66
    %v159 = vunpack.c.h.b16 %v66
    %v160 = vunpack.c.l.b16 %v67
    %v161 = vunpack.c.l.b16 %v68
    %v162 = vunpack.c.h.b16 %v68
    %v163 = vunpack.c.l.b16 %v69
    %v164 = vunpack.c.l.b16 %v70
    %v165 = vunpack.c.h.b16 %v70
    %v166 = vunpack.c.l.b16 %v71
    %v167 = vunpack.c.l.b16 %v72
    %v168 = vunpack.c.h.b16 %v72
    %v169 = vunpack.c.l.b16 %v73
    %v170 = vunpack.c.l.b16 %v74
    %v171 = vunpack.c.h.b16 %v74
    %v172 = vunpack.c.l.b16 %v75
    %v173 = vpack.c.b16 %v128, %v125
    %v174 = vpack.c.b16 %v129, %v126
    %v175 = vpack.c.b16 %v130, %v127
    %v176 = vpack.c.b16 %v134, %v131
    %v177 = vpack.c.b16 %v135, %v132
    %v178 = vpack.c.b16 %v136, %v133
    %v179 = vpack.c.b16 %v140, %v137
    %v180 = vpack.c.b16 %v141, %v138
    %v181 = vpack.c.b16 %v142, %v139
    %v182 = vpack.c.b16 %v146, %v143
    %v183 = vpack.c.b16 %v147, %v144
    %v184 = vpack.c.b16 %v148, %v145
    %v185 = vpack.c.b16 %v152, %v149
    %v186 = vpack.c.b16 %v153, %v150
    %v187 = vpack.c.b16 %v154, %v151
    %v188 = vpack.c.b16 %v158, %v155
    %v189 = vpack.c.b16 %v159, %v156
    %v190 = vpack.c.b16 %v160, %v157
    %v191 = vpack.c.b16 %v164, %v161
    %v192 = vpack.c.b16 %v165, %v162
    %v193 = vpack.c.b16 %v166, %v163
    %v194 = vpack.c.b16 %v170, %v167
    %v195 = vpack.c.b16 %v171, %v168
    %v196 = vpack.c.b16 %v172, %v169
    %221 = vmatprep.subr.bf16.mxu0 %v174
    %222 = vmatpush1.bf16.msra.mxu0 %v173
    %223 = vmatprep.subr.bf16.mxu0 %v177
    %224 = vmatpush1.bf16.msra.mxu0 %v176
    %225 = vmatprep.subr.bf16.mxu0 %v180
    %226 = vmatpush1.bf16.msra.mxu0 %v179
    %227 = vmatprep.subr.bf16.mxu0 %v183
    %228 = vmatpush1.bf16.msra.mxu0 %v182
    %229 = vmatprep.subr.bf16.mxu0 %v186
    %230 = vmatpush1.bf16.msra.mxu0 %v185
    %231 = vmatprep.subr.bf16.mxu0 %v189
    %232 = vmatpush1.bf16.msra.mxu0 %v188
    %233 = vmatprep.subr.bf16.mxu0 %v192
    %234 = vmatpush1.bf16.msra.mxu0 %v191
    %235 = vmatprep.subr.bf16.mxu0 %v195
    %236 = vmatpush1.bf16.msra.mxu0 %v194
    %237 = vmatprep.subr.bf16.mxu0 0
    %238 = vmatpush1.bf16.msra.mxu0 0
    %239 = vmatprep.subr.bf16.mxu0 0
    %240 = vmatpush1.bf16.msra.mxu0 0
    %241 = vmatprep.subr.bf16.mxu0 0
    %242 = vmatpush1.bf16.msra.mxu0 0
    %243 = vmatprep.subr.bf16.mxu0 0
    %244 = vmatpush1.bf16.msra.mxu0 0
    %245 = vmatprep.subr.bf16.mxu0 0
    %246 = vmatpush1.bf16.msra.mxu0 0
    %247 = vmatprep.subr.bf16.mxu0 0
    %248 = vmatpush1.bf16.msra.mxu0 0
    %249 = vmatprep.subr.bf16.mxu0 0
    %250 = vmatpush1.bf16.msra.mxu0 0
    %251 = vmatprep.subr.bf16.mxu0 0
    %252 = vmatpush1.bf16.msra.mxu0 0
    %253 = vmatprep.mubr.bf16.mxu0 0
    %254 = vmatmul.mubr.bf16.gmra.mrb[0].mxu0 %v43
    %v255 = vpop.f32.mrb[0].mxu0
    %v256 = vadd.f32 %v81, %v255
    %v257 = vpop.f32.mrb[0].mxu0
    %v258 = vadd.f32 %v85, %v257
    %v259 = vpop.f32.mrb[0].mxu0
    %v260 = vpop.f32.mrb[0].mxu0
    %261 = vdwg.mxu0
    %262 = vmatprep.subr.bf16.mxu0 0
    %263 = vmatpush1.bf16.msra.mxu0 %v175
    %264 = vmatprep.subr.bf16.mxu0 0
    %265 = vmatpush1.bf16.msra.mxu0 %v178
    %266 = vmatprep.subr.bf16.mxu0 0
    %267 = vmatpush1.bf16.msra.mxu0 %v181
    %268 = vmatprep.subr.bf16.mxu0 0
    %269 = vmatpush1.bf16.msra.mxu0 %v184
    %270 = vmatprep.subr.bf16.mxu0 0
    %271 = vmatpush1.bf16.msra.mxu0 %v187
    %272 = vmatprep.subr.bf16.mxu0 0
    %273 = vmatpush1.bf16.msra.mxu0 %v190
    %274 = vmatprep.subr.bf16.mxu0 0
    %275 = vmatpush1.bf16.msra.mxu0 %v193
    %276 = vmatprep.subr.bf16.mxu0 0
    %277 = vmatpush1.bf16.msra.mxu0 %v196
    %278 = vmatprep.subr.bf16.mxu0 0
    %279 = vmatpush1.bf16.msra.mxu0 0
    %280 = vmatprep.subr.bf16.mxu0 0
    %281 = vmatpush1.bf16.msra.mxu0 0
    %282 = vmatprep.subr.bf16.mxu0 0
    %283 = vmatpush1.bf16.msra.mxu0 0
    %284 = vmatprep.subr.bf16.mxu0 0
    %285 = vmatpush1.bf16.msra.mxu0 0
    %286 = vmatprep.subr.bf16.mxu0 0
    %287 = vmatpush1.bf16.msra.mxu0 0
    %288 = vmatprep.subr.bf16.mxu0 0
    %289 = vmatpush1.bf16.msra.mxu0 0
    %290 = vmatprep.subr.bf16.mxu0 0
    %291 = vmatpush1.bf16.msra.mxu0 0
    %292 = vmatprep.subr.bf16.mxu0 0
    %293 = vmatpush1.bf16.msra.mxu0 0
    %294 = vmatprep.mubr.bf16.mxu0 0
    %295 = vmatmul.mubr.bf16.gmra.mrb[0].mxu0 %v43
    %v296 = vpop.f32.mrb[0].mxu0
    %v297 = vadd.f32 %v89, %v296
    %v298 = vpop.f32.mrb[0].mxu0
    %v299 = vpop.f32.mrb[0].mxu0
    %v300 = vpop.f32.mrb[0].mxu0
    %301 = vdwg.mxu0
    %302 = vst [vmem:[#allocation7] sm:$0xff] %v256
    %303 = vst [vmem:[#allocation7 + $0x8] sm:$0xff] %v258
    %304 = vst [vmem:[#allocation7 + $0x10] sm:$0xff] %v297
    // Predicated region
    $region22: #{tpu_custom_call.1} parent=1 // pred_check
      _
    $region23: #{tpu_custom_call.1} parent=1 // pred_check_branch
      %306 = sbr.rel (0) target = $region25
    $region24: #{tpu_custom_call.1} parent=1 // pred_region
      %s308 = ssub.s32 384, 384
      %309 = vsyncadd [#allocation4], %s308
      %s311 = sshll.u32 [#allocation7], 4
      %s312 = int_to_ptr.vmem [resolvable:$true] %s311
      %314 = dma.vmem_to_hbm [thread:$0]  %s312, 384, %s3, [#allocation4]
    $region25: #{tpu_custom_call.1} parent=1 // pred_fallthru
      _
    // Predicated region
    $region26: #{tpu_custom_call.1} parent=1 // pred_check
      _
    $region27: #{tpu_custom_call.1} parent=1 // pred_check_branch
      %316 = sbr.rel (0) target = $region29
    $region28: #{tpu_custom_call.1} parent=1 // pred_region
      %317 = dma.done [#allocation4], 384
    $region29: #{tpu_custom_call.1} parent=1 // pred_fallthru
      _
    %318 = vsyncpa [#allocation3], 1
    %319 = vsyncpa [#allocation6], 1
    %320 = vsyncpa [#allocation4], 1

</llo_original>
